<compile_context>
chip_gen: v5e
topology: v5e:2x2
jax: 0.10.0
libtpu: 0.0.40
codegen_flags: <defaults>
</compile_context>

<pallas_src>
import functools

import jax
import jax.numpy as jnp
from jax import lax
from jax.experimental import pallas as pl
from jax.experimental.pallas import tpu as pltpu


def _round_up(v, m):
    return (v + m - 1) // m * m


def _partition_loss_kernel(x_ref, o_ref, acc_ref, *, num_batch, num_head, feat,
                           block_rows, chunk_rows):
    """Grid axis 0 walks batch blocks of the (B, H*C)-reshaped input.

    acc_ref (1, H*C) accumulates sum over rows/lanes of (x - head_mean)^2.
    """
    i = pl.program_id(0)
    nsteps = pl.num_programs(0)
    lanes = num_head * feat
    inv_h = 1.0 / num_head

    @pl.when(i == 0)
    def _init():
        acc_ref[...] = jnp.zeros_like(acc_ref)

    def head_sum(xc):
        # Replicated per-(b, c) sum over heads: lane p = h*feat + c picks up
        # every h'*feat + c via circular lane rolls in multiples of `feat`.
        if (num_head & (num_head - 1)) == 0:        # power of two: log2(H) rolls
            s, shift = xc, feat
            while shift < lanes:
                s = s + pltpu.roll(s, shift=shift, axis=1)
                shift *= 2
            return s
        s = xc                                      # general H: H-1 rolls
        for k in range(1, num_head):
            s = s + pltpu.roll(xc, shift=k * feat, axis=1)
        return s

    def accumulate_chunk(ci, masked):
        r0 = ci * chunk_rows                        # static, sublane-aligned
        xc = x_ref[pl.ds(r0, chunk_rows), :].astype(jnp.float32)   # (CR, H*C)
        d = xc - head_sum(xc) * inv_h               # centered deviations
        contrib = d * d   # sum over lanes == (H-1) * sum_c var[b, c]  (unbiased)
        if masked:
            # Rows past B hold unspecified block padding; zero them BEFORE the
            # reduction below (do not reorder).
            row = lax.broadcasted_iota(jnp.int32, contrib.shape, 0)
            valid = (i * block_rows + r0 + row) < num_batch
            contrib = jnp.where(valid, contrib, 0.0)
        # Sublane reduce (XLU) -> tiny (1, H*C) accumulator RMW per chunk.
        acc_ref[...] += jnp.sum(contrib, axis=0, keepdims=True)

    def run_block(masked):
        for ci in range(block_rows // chunk_rows):  # short static unroll
            accumulate_chunk(ci, masked)

    if num_batch % block_rows == 0:
        run_block(masked=False)                     # no tail -> never mask
    else:
        @pl.when(i < nsteps - 1)
        def _full_blocks():
            run_block(masked=False)

        @pl.when(i == nsteps - 1)
        def _tail_block():
            run_block(masked=True)

    @pl.when(i == nsteps - 1)
    def _finalize():
        total = jnp.sum(acc_ref[...])               # single cross-lane reduce
        denom = float((num_head - 1) * num_batch * feat)
        mean_var = total / denom
        # mean_var == 0 (all-constant x) -> +inf, matching torch.log(1 + H/0).
        loss = jnp.log(1.0 + num_head / mean_var)
        o_ref[...] = jnp.full((1, 1), loss, dtype=jnp.float32)


def partition_loss(x, *, block_rows=None, target_block_bytes=8 * 1024 * 1024,
                   chunk_bytes=1024 * 1024):
    """loss = log(1 + H / x.var(dim=1, unbiased=True).mean()); x is (B, H, ...)."""
    x = jnp.asarray(x)
    if x.ndim < 2:
        raise ValueError(f"expected x with shape (B, H, ...), got {x.shape}")
    B, H = int(x.shape[0]), int(x.shape[1])
    if H <= 1:
        return jnp.float32(0.0)       # PyTorch returns 0 for a single head

    C = 1
    for d in x.shape[2:]:
        C *= int(d)
    L = H * C
    x2 = x.reshape(B, L)              # free: row-major contiguous, no transpose

    itemsize = x2.dtype.itemsize
    sub = max(8, 32 // max(1, itemsize))   # sublane rows per tile: 8/16/32
    lpad = _round_up(L, 128)               # lanes pad to 128 in VMEM

    # --- row-chunk size: ~chunk_bytes of f32 temporaries, multiple of `sub` ---
    cr = max(sub, (max(1, chunk_bytes // (lpad * 4)) // sub) * sub)
    cr = min(cr, _round_up(B, sub))

    # --- batch block size from the *padded* input VMEM footprint ---
    if block_rows is not None:
        tb = max(sub, _round_up(int(block_rows), sub))
        cr = min(cr, tb)
        tb = _round_up(tb, cr)
    else:
        tb = max(cr, (max(1, target_block_bytes // (lpad * itemsize)) // cr) * cr)
        tb = min(tb, _round_up(B, cr))
    assert tb % cr == 0 and cr % sub == 0

    num_blocks = pl.cdiv(B, tb)

    # Scoped-VMEM budget from the padded footprint: double-buffered input block
    # + a handful of f32 chunk-sized temporaries + the (1, H*C) accumulator.
    vmem_need = (2 * tb * lpad * itemsize          # pipelined input buffers
                 + 8 * cr * lpad * 4               # chunk f32 intermediates
                 + 8 * lpad * 4                    # accumulator (sublane-padded)
                 + (1 << 20))                      # headroom / internal scratch
    vmem_limit = int(min(max(vmem_need, 16 << 20), 96 << 20))

    out = pl.pallas_call(
        functools.partial(
            _partition_loss_kernel,
            num_batch=B, num_head=H, feat=C, block_rows=tb, chunk_rows=cr),
        out_shape=jax.ShapeDtypeStruct((1, 1), jnp.float32),
        grid=(num_blocks,),
        in_specs=[pl.BlockSpec((tb, L), lambda i: (i, 0))],
        out_specs=pl.BlockSpec((1, 1), lambda i: (0, 0)),
        scratch_shapes=[pltpu.VMEM((1, L), jnp.float32)],
        compiler_params=pltpu.CompilerParams(
            # Single reduction axis feeding an accumulator -> "arbitrary".
            dimension_semantics=("arbitrary",),
            vmem_limit_bytes=vmem_limit,
        ),
    )(x2)
    return out[0, 0]


def _partition_loss_ref(x):
    """Plain-JAX reference of the PyTorch semantics (unbiased var over dim 1)."""
    x = jnp.asarray(x, jnp.float32)
    B, H = x.shape[0], x.shape[1]
    xr = x.reshape(B, H, -1)
    mean = jnp.mean(xr, axis=1, keepdims=True)
    var = jnp.sum((xr - mean) ** 2, axis=1) / (H - 1)
    return jnp.log(1.0 + H / jnp.mean(var))


if __name__ == "__main__":
    key = jax.random.PRNGKey(0)

    # 1) Small shape implied by the module: (batch=2, num_head=4, feat=32).
    x1 = jax.random.normal(key, (2, 4, 32), dtype=jnp.float32)
    loss1 = partition_loss(x1)
    jax.block_until_ready(loss1)
    ref1 = _partition_loss_ref(x1)
    assert jnp.allclose(loss1, ref1, rtol=1e-4, atol=1e-6), (loss1, ref1)

    # 2) Batch tiling + partial-last-block masking (5 grid steps, 5-row tail).
    x2 = 0.5 + 0.3 * jax.random.normal(jax.random.fold_in(key, 1), (37, 4, 96),
                                       dtype=jnp.float32)
    loss2 = partition_loss(x2, block_rows=8)
    ref2 = _partition_loss_ref(x2)
    assert jnp.allclose(loss2, ref2, rtol=1e-4, atol=1e-6), (loss2, ref2)

    # 3) bf16 input path (DMA stays bf16; per-chunk upcast to f32 in-kernel).
    xb = x2.astype(jnp.bfloat16)
    loss3 = partition_loss(xb, block_rows=16)
    ref3 = _partition_loss_ref(xb.astype(jnp.float32))
    assert jnp.allclose(loss3, ref3, rtol=1e-3, atol=1e-5), (loss3, ref3)

    # 4) Multi-chunk inner loop + multi-block grid, exact divisibility (no mask).
    x4 = jax.random.normal(jax.random.fold_in(key, 2), (64, 4, 32), jnp.float32)
    loss4 = partition_loss(x4, block_rows=32, chunk_bytes=4096)
    ref4 = _partition_loss_ref(x4)
    assert jnp.allclose(loss4, ref4, rtol=1e-4, atol=1e-6), (loss4, ref4)

    # 5) Single-head short-circuit matches the PyTorch `loss = 0` branch.
    assert float(partition_loss(jnp.ones((3, 1, 8), jnp.float32))) == 0.0

    print("KERNEL_OK")
</pallas_src>

<mosaic_0001>
module attributes {stable_mosaic.version = 11 : i64} {
  func.func @_partition_loss_kernel(%arg0: i32, %arg1: memref<8x128xf32, #tpu.memory_space<vmem>>, %arg2: memref<1x1xf32, #tpu.memory_space<vmem>>, %arg3: memref<1x128xf32, #tpu.memory_space<vmem>>) attributes {dimension_semantics = [#tpu.dimension_semantics<arbitrary>], iteration_bounds = array<i64: 1>, scalar_prefetch = 0 : i64, scratch_operands = 1 : i64, tpu.core_type = #tpu.core_type<tc>, window_params = [{transform_indices = @transform_0, window_bounds = array<i64: 8, 128>}, {pipeline_mode = #tpu.pipeline_mode<synchronous>, transform_indices = @transform_1, window_bounds = array<i64: 1, 1>}]} {
    %c0_i32 = arith.constant 0 : i32
    %0 = arith.cmpi eq, %arg0, %c0_i32 : i32
    %1 = arith.extui %0 : i1 to i32
    %c0_i32_0 = arith.constant 0 : i32
    %2 = arith.cmpi ne, %1, %c0_i32_0 : i32
    scf.if %2 {
      %cst = arith.constant 0.000000e+00 : f32
      %12 = vector.broadcast %cst : f32 to vector<1x128xf32>
      %c0 = arith.constant 0 : index
      %c0_7 = arith.constant 0 : index
      %13 = vector.load %arg3[%c0, %c0_7] : memref<1x128xf32, #tpu.memory_space<vmem>>, vector<1x128xf32>
      tpu.vector_store %arg3[%c0, %c0_7], %12 {strides = array<i32>} : memref<1x128xf32, #tpu.memory_space<vmem>>, vector<1x128xf32>,
    } else {
    }
    %c0_i32_1 = arith.constant 0 : i32
    %3 = arith.cmpi slt, %arg0, %c0_i32_1 : i32
    %4 = arith.extui %3 : i1 to i32
    %c0_i32_2 = arith.constant 0 : i32
    %5 = arith.cmpi ne, %4, %c0_i32_2 : i32
    scf.if %5 {
      %c0 = arith.constant 0 : index
      %c0_7 = arith.constant 0 : index
      %12 = vector.load %arg1[%c0, %c0_7] : memref<8x128xf32, #tpu.memory_space<vmem>>, vector<8x128xf32>
      %c32_i32 = arith.constant 32 : i32
      %13 = tpu.dynamic_rotate %12 by %c32_i32 dim 1 : vector<8x128xf32>, i32 -> vector<8x128xf32>
      %14 = arith.addf %12, %13 : vector<8x128xf32>
      %c64_i32 = arith.constant 64 : i32
      %15 = tpu.dynamic_rotate %14 by %c64_i32 dim 1 : vector<8x128xf32>, i32 -> vector<8x128xf32>
      %16 = arith.addf %14, %15 : vector<8x128xf32>
      %cst = arith.constant 2.500000e-01 : f32
      %17 = vector.broadcast %cst : f32 to vector<8x128xf32>
      %18 = arith.mulf %16, %17 : vector<8x128xf32>
      %19 = arith.subf %12, %18 : vector<8x128xf32>
      %20 = arith.mulf %19, %19 : vector<8x128xf32>
      %c0_8 = arith.constant 0 : index
      %c0_9 = arith.constant 0 : index
      %21 = vector.load %arg3[%c0_8, %c0_9] : memref<1x128xf32, #tpu.memory_space<vmem>>, vector<1x128xf32>
      %cst_10 = arith.constant dense<0.000000e+00> : vector<128xf32>
      %22 = vector.multi_reduction <add>, %20, %cst_10 [0] : vector<8x128xf32> to vector<128xf32>
      %23 = vector.shape_cast %22 : vector<128xf32> to vector<1x128xf32>
      %24 = arith.addf %21, %23 : vector<1x128xf32>
      %c0_11 = arith.constant 0 : index
      %c0_12 = arith.constant 0 : index
      %25 = vector.load %arg3[%c0_11, %c0_12] : memref<1x128xf32, #tpu.memory_space<vmem>>, vector<1x128xf32>
      tpu.vector_store %arg3[%c0_11, %c0_12], %24 {strides = array<i32>} : memref<1x128xf32, #tpu.memory_space<vmem>>, vector<1x128xf32>,
    } else {
    }
    %c0_i32_3 = arith.constant 0 : i32
    %6 = arith.cmpi eq, %arg0, %c0_i32_3 : i32
    %7 = arith.extui %6 : i1 to i32
    %c0_i32_4 = arith.constant 0 : i32
    %8 = arith.cmpi ne, %7, %c0_i32_4 : i32
    scf.if %8 {
      %c0 = arith.constant 0 : index
      %c0_7 = arith.constant 0 : index
      %12 = vector.load %arg1[%c0, %c0_7] : memref<8x128xf32, #tpu.memory_space<vmem>>, vector<8x128xf32>
      %c32_i32 = arith.constant 32 : i32
      %13 = tpu.dynamic_rotate %12 by %c32_i32 dim 1 : vector<8x128xf32>, i32 -> vector<8x128xf32>
      %14 = arith.addf %12, %13 : vector<8x128xf32>
      %c64_i32 = arith.constant 64 : i32
      %15 = tpu.dynamic_rotate %14 by %c64_i32 dim 1 : vector<8x128xf32>, i32 -> vector<8x128xf32>
      %16 = arith.addf %14, %15 : vector<8x128xf32>
      %cst = arith.constant 2.500000e-01 : f32
      %17 = vector.broadcast %cst : f32 to vector<8x128xf32>
      %18 = arith.mulf %16, %17 : vector<8x128xf32>
      %19 = arith.subf %12, %18 : vector<8x128xf32>
      %20 = arith.mulf %19, %19 : vector<8x128xf32>
      %21 = tpu.iota {dimensions = array<i32: 0>} : vector<8x128xi32>
      %c8_i32 = arith.constant 8 : i32
      %22 = arith.muli %arg0, %c8_i32 : i32
      %c0_i32_8 = arith.constant 0 : i32
      %23 = arith.addi %22, %c0_i32_8 : i32
      %24 = vector.broadcast %23 : i32 to vector<8x128xi32>
      %25 = arith.addi %24, %21 : vector<8x128xi32>
      %c2_i32 = arith.constant 2 : i32
      %26 = vector.broadcast %c2_i32 : i32 to vector<8x128xi32>
      %27 = arith.cmpi slt, %25, %26 : vector<8x128xi32>
      %cst_9 = arith.constant 0.000000e+00 : f32
      %28 = vector.broadcast %cst_9 : f32 to vector<8x128xf32>
      %29 = arith.select %27, %20, %28 : vector<8x128xi1>, vector<8x128xf32>
      %c0_10 = arith.constant 0 : index
      %c0_11 = arith.constant 0 : index
      %30 = vector.load %arg3[%c0_10, %c0_11] : memref<1x128xf32, #tpu.memory_space<vmem>>, vector<1x128xf32>
      %cst_12 = arith.constant dense<0.000000e+00> : vector<128xf32>
      %31 = vector.multi_reduction <add>, %29, %cst_12 [0] : vector<8x128xf32> to vector<128xf32>
      %32 = vector.shape_cast %31 : vector<128xf32> to vector<1x128xf32>
      %33 = arith.addf %30, %32 : vector<1x128xf32>
      %c0_13 = arith.constant 0 : index
      %c0_14 = arith.constant 0 : index
      %34 = vector.load %arg3[%c0_13, %c0_14] : memref<1x128xf32, #tpu.memory_space<vmem>>, vector<1x128xf32>
      tpu.vector_store %arg3[%c0_13, %c0_14], %33 {strides = array<i32>} : memref<1x128xf32, #tpu.memory_space<vmem>>, vector<1x128xf32>,
    } else {
    }
    %c0_i32_5 = arith.constant 0 : i32
    %9 = arith.cmpi eq, %arg0, %c0_i32_5 : i32
    %10 = arith.extui %9 : i1 to i32
    %c0_i32_6 = arith.constant 0 : i32
    %11 = arith.cmpi ne, %10, %c0_i32_6 : i32
    scf.if %11 {
      %c0 = arith.constant 0 : index
      %c0_7 = arith.constant 0 : index
      %12 = vector.load %arg3[%c0, %c0_7] : memref<1x128xf32, #tpu.memory_space<vmem>>, vector<1x128xf32>
      %13 = vector.shape_cast %12 : vector<1x128xf32> to vector<1x1x128xf32>
      %cst = arith.constant dense<0.000000e+00> : vector<1xf32>
      %14 = vector.multi_reduction <add>, %13, %cst [1, 2] : vector<1x1x128xf32> to vector<1xf32>
      %15 = vector.shape_cast %14 : vector<1xf32> to vector<1x1x1xf32>
      %16 = vector.extract %15[0, 0, 0] : f32 from vector<1x1x1xf32>
      %cst_8 = arith.constant 1.920000e+02 : f32
      %17 = arith.divf %16, %cst_8 : f32
      %cst_9 = arith.constant 4.000000e+00 : f32
      %18 = arith.divf %cst_9, %17 : f32
      %cst_10 = arith.constant 1.000000e+00 : f32
      %19 = arith.addf %cst_10, %18 : f32
      %20 = math.log %19 : f32
      %21 = vector.broadcast %20 : f32 to vector<1x1xf32>
      %c0_11 = arith.constant 0 : index
      %c0_12 = arith.constant 0 : index
      %22 = vector.load %arg2[%c0_11, %c0_12] : memref<1x1xf32, #tpu.memory_space<vmem>>, vector<1x1xf32>
      tpu.vector_store %arg2[%c0_11, %c0_12], %21 {strides = array<i32>} : memref<1x1xf32, #tpu.memory_space<vmem>>, vector<1x1xf32>,
    } else {
    }
    return
  }
  func.func @transform_0(%arg0: i32) -> (i32, i32) {
    %c0_i32 = arith.constant 0 : i32
    %c0_i32_0 = arith.constant 0 : i32
    return %arg0, %c0_i32 : i32, i32
  }
  func.func @transform_1(%arg0: i32) -> (i32, i32) {
    %c0_i32 = arith.constant 0 : i32
    %c0_i32_0 = arith.constant 0 : i32
    %c0_i32_1 = arith.constant 0 : i32
    return %c0_i32, %c0_i32_0 : i32, i32
  }
}

</mosaic_0001>

<llo_original>
// kernel: tpu_custom_call.1
$region0: #{tpu_custom_call.1}
  #allocation0 [shape = 'u32[]', space=smem, size = 0x4, offset = 0x4, fixed_abs, tag = 'smem constant byte address 0x4 - core index']
  #allocation1 [shape = 'u32[72,128]{1,0:T(1,128)}', space=vmem, size = 0x9000, scoped, tag = 'internal scratch']
  #allocation2 [shape = 'f32[1,128]{1,0:T(1,128)}', space=vmem, size = 0x200, scoped, tag = 'scratch operand']
  %s0 = inlined_call_operand.hbm [shape: f32[2,128], index: 0, kind: input, shape index: {}]
  %s1 = inlined_call_operand.hbm [shape: f32[1,1], index: 1, kind: output, shape index: {}]
  %s2 = sld [smem:[#allocation0]]
  $region30: #{tpu_custom_call.1} parent=0
    _
  %s4 = ssub.s32 1, %s2
  %s5 = scalar_select 0, %s4, %s2
  $region1: #{tpu_custom_call.1} parent=0
    #allocation3 [shape = 'u8[4096]{0}', space=vmem, size = 0x1000, scoped, tag = 'input window, operand 0, single buffered']
    #allocation4 [shape = 's32[1]{0}', space=sflag, size = 0x4, scoped, tag = 'scoped memory for tpu_custom_call.1']
    #allocation5 [shape = 's32[1]{0}', space=sflag, size = 0x4, scoped, tag = 'scoped memory for tpu_custom_call.1']
    #allocation6 [shape = 'u8[512]{0}', space=vmem, size = 0x400, scoped, tag = 'output window, operand 0, single buffered']
    %6 = vsyncpa [#allocation4], 0
    %7 = vsyncpa [#allocation5], 0
    // Predicated region
    $region2: #{tpu_custom_call.1} parent=1 // pred_check
      _
    $region3: #{tpu_custom_call.1} parent=1 // pred_check_branch
      %9 = sbr.rel (0) target = $region5
    $region4: #{tpu_custom_call.1} parent=1 // pred_region
      %11 = vsyncadd [#allocation4], 96
      %s12 = sshll.u32 %s0, 4
      %s13 = int_to_ptr.hbm [resolvable:$true] %s12
      %s14 = sshll.u32 [#allocation3], 4
      %s15 = int_to_ptr.vmem [resolvable:$true] %s14
      %20 = dma.hbm_to_vmem [thread:$0]  %s13, 32, %s15, [#allocation4], 32, 32, 2
    $region5: #{tpu_custom_call.1} parent=1 // pred_fallthru
      _
    // Predicated region
    $region6: #{tpu_custom_call.1} parent=1 // pred_check
      _
    $region7: #{tpu_custom_call.1} parent=1 // pred_check_branch
      %22 = sbr.rel (0) target = $region9
    $region8: #{tpu_custom_call.1} parent=1 // pred_region
      %24 = dma.done [#allocation4], 128
    $region9: #{tpu_custom_call.1} parent=1 // pred_fallthru
      _
    %p25 = scmp.eq.s32.totalorder 0, 0
    // Predicated region
    $region10: #{tpu_custom_call.1} parent=1 // pred_check
      %p26 = pneg %p25
    $region11: #{tpu_custom_call.1} parent=1 // pred_check_branch
      %28 = sbr.rel (%p26) target = $region13
    $region12: #{tpu_custom_call.1} parent=1 // pred_region
      %29 = vst [vmem:[#allocation2] sm:$0x1] 0.0
    $region13: #{tpu_custom_call.1} parent=1 // pred_fallthru
      _
    %p30 = scmp.lt.s32.totalorder 0, 0
    // Predicated region
    $region14: #{tpu_custom_call.1} parent=1 // pred_check
      %p31 = pneg %p30
    $region15: #{tpu_custom_call.1} parent=1 // pred_check_branch
      %33 = sbr.rel (%p31) target = $region17
    $region16: #{tpu_custom_call.1} parent=1 // pred_region
      %v34 = vld [vmem:[#allocation3] sm:$0xff]
      %35 = vrot.lane.b32.xlu0 %v34, 32
      %v36 = vpop.permute.xlu0 %35
      %v37 = vadd.f32 %v34, %v36
      %38 = vrot.lane.b32.xlu0 %v37, 64
      %v39 = vpop.permute.xlu0 %38
      %v40 = vadd.f32 %v37, %v39
      %v41 = vmul.f32 %v40, 0.25
      %v42 = vsub.f32 %v34, %v41
      %v43 = vmul.f32 %v42, %v42
      %v44 = vld [vmem:[#allocation2] sm:$0x1]
      %v45 = vrot.slane %v43, 4
      %v46 = vadd.f32 %v43, %v45
      %v47 = vrot.slane %v46, 2
      %v48 = vadd.f32 %v46, %v47
      %v49 = vrot.slane %v48, 1
      %v50 = vadd.f32 %v48, %v49
      %v51 = vadd.f32 %v44, %v50
      %52 = vst [vmem:[#allocation2] sm:$0x1] %v51
    $region17: #{tpu_custom_call.1} parent=1 // pred_fallthru
      _
    // Predicated region
    $region18: #{tpu_custom_call.1} parent=1 // pred_check
      %p53 = pneg %p25
    $region19: #{tpu_custom_call.1} parent=1 // pred_check_branch
      %55 = sbr.rel (%p53) target = $region21
    $region20: #{tpu_custom_call.1} parent=1 // pred_region
      %v56 = vld [vmem:[#allocation3] sm:$0xff]
      %57 = vrot.lane.b32.xlu0 %v56, 32
      %v58 = vpop.permute.xlu0 %57
      %v59 = vadd.f32 %v56, %v58
      %60 = vrot.lane.b32.xlu0 %v59, 64
      %v61 = vpop.permute.xlu0 %60
      %v62 = vadd.f32 %v59, %v61
      %v63 = vmul.f32 %v62, 0.25
      %v64 = vsub.f32 %v56, %v63
      %v65 = vmul.f32 %v64, %v64
      %v66 = vlaneseq
      %v67 = vshrl.u32 %v66, 7
      %s68 = smul.u32 0, 8
      %v69 = vstv %s68
      %v70 = vadd.s32 %v69, %v67
      %vm71 = vcmp.lt.s32.totalorder %v70, 2
      %v72 = vsel %vm71, %v65, 0.0
      %v73 = vld [vmem:[#allocation2] sm:$0x1]
      %v74 = vrot.slane %v72, 4
      %v75 = vadd.f32 %v72, %v74
      %v76 = vrot.slane %v75, 2
      %v77 = vadd.f32 %v75, %v76
      %v78 = vrot.slane %v77, 1
      %v79 = vadd.f32 %v77, %v78
      %v80 = vadd.f32 %v73, %v79
      %81 = vst [vmem:[#allocation2] sm:$0x1] %v80
      %v82 = vld [vmem:[#allocation2] sm:$0x1]
      %vm83 = vcmask 1040384
      %v84 = vsel %vm83, %v82, 0.0
      %85 = vadd.xlane.f32.xlu0 %v84
      %v86 = vpop.xlane.xlu0 %85
      %v87 = vrot.slane %v86, 4
      %v88 = vadd.f32 %v86, %v87
      %v89 = vrot.slane %v88, 2
      %v90 = vadd.f32 %v88, %v89
      %v91 = vrot.slane %v90, 1
      %v92 = vadd.f32 %v90, %v91
      %s93 = vtos %v92
      %v94 = vrcp.pop 192.0
      %v95 = vmul.f32 192.0, %v94
      %v96 = vsub.f32 1.0, %v95
      %v97 = vmul.f32 %v94, %v96
      %v98 = vadd.f32 %v94, %v97
      %vm99 = vweird.f32 %v94
      %v100 = vsel %vm99, %v94, %v98
      %s101 = vtos %v100
      %s102 = smul.f32 %s93, %s101
      %v103 = vstv %s102
      %v104 = vrcp.pop %v103
      %v105 = vmul.f32 %v103, %v104
      %v106 = vsub.f32 1.0, %v105
      %v107 = vmul.f32 %v104, %v106
      %v108 = vadd.f32 %v104, %v107
      %vm109 = vweird.f32 %v103
      %vm110 = vweird.f32 %v104
      %vm111 = vmor %vm109, %vm110
      %v112 = vsel %vm111, %v104, %v108
      %v113 = vand.u32 2147483647, %v103
      %vm114 = vcmp.eq.f32.partialorder %v113, 8.507059e+37
      %v115 = vand.u32 %v103, 2147483648
      %v116 = vor.u32 1.1754944e-38, %v115
      %v117 = vsel %vm114, %v116, %v112
      %s118 = vtos %v117
      %s119 = smul.f32 4.0, %s118
      %s120 = sadd.f32 %s119, 1.0
      %v121 = vstv %s120
      %v122 = vlog2.pop %v121
      %v123 = vmul.f32 %v122, 0.6931472
      %s124 = vtos %v123
      %v125 = vstv %s124
      %vm126 = vcmask 0
      %127 = vst.msk [vmem:[#allocation6] sm:$0x1] %vm126, %v125
    $region21: #{tpu_custom_call.1} parent=1 // pred_fallthru
      _
    // Predicated region
    $region22: #{tpu_custom_call.1} parent=1 // pred_check
      _
    $region23: #{tpu_custom_call.1} parent=1 // pred_check_branch
      %129 = sbr.rel (0) target = $region25
    $region24: #{tpu_custom_call.1} parent=1 // pred_region
      %131 = vsyncadd [#allocation5], 0
      %s133 = sshll.u32 [#allocation6], 4
      %s134 = int_to_ptr.vmem [resolvable:$true] %s133
      %s135 = sshll.u32 %s1, 4
      %s136 = int_to_ptr.hbm [resolvable:$true] %s135
      %138 = dma.vmem_to_hbm [thread:$0]  %s134, 16, %s136, [#allocation5]
    $region25: #{tpu_custom_call.1} parent=1 // pred_fallthru
      _
    // Predicated region
    $region26: #{tpu_custom_call.1} parent=1 // pred_check
      _
    $region27: #{tpu_custom_call.1} parent=1 // pred_check_branch
      %140 = sbr.rel (0) target = $region29
    $region28: #{tpu_custom_call.1} parent=1 // pred_region
      %142 = dma.done [#allocation5], 16
    $region29: #{tpu_custom_call.1} parent=1 // pred_fallthru
      _
    %143 = vsyncpa [#allocation4], 1
    %144 = vsyncpa [#allocation5], 1

</llo_original>
